<compile_context>
chip_gen: v7x
topology: tpu7x:2x2x1
jax: 0.10.0
libtpu: 0.0.40
codegen_flags: <defaults>
</compile_context>

<pallas_src>
import math
import jax
import jax.numpy as jnp
from jax.experimental import pallas as pl
from jax.experimental.pallas import tpu as pltpu


def _round_up(v, m):
    return ((v + m - 1) // m) * m


def _mamba_cell_kernel(x_row_ref, x_src_ref, adj_ref, w_self_ref, w_nei_ref,
                       b_ref, out_ref, acc_ref):
    k = pl.program_id(1)

    # Initialize the per-row-tile accumulator with the self term + fused bias.
    @pl.when(k == 0)
    def _init():
        acc_ref[...] = jnp.dot(
            x_row_ref[...], w_self_ref[...],
            preferred_element_type=jnp.float32) + b_ref[...]

    # Partial neighbor aggregation for this source tile.
    # int8 adjacency block widened on the VPU (exact for multiplicities <= 127);
    # the int8->int32->f32->bf16 chain uses only universally supported casts and
    # is free under the HBM/MXU-bound stream.
    adj_blk = (adj_ref[...]
               .astype(jnp.int32)
               .astype(jnp.float32)
               .astype(jnp.bfloat16))
    agg = jnp.dot(adj_blk, x_src_ref[...],
                  preferred_element_type=jnp.float32)          # [tile_n, f_in] f32
    # Feature matmul stays f32 (K = f_in is tiny -> negligible MXU cost) so the
    # partial aggregation never round-trips through bf16.
    acc_ref[...] += jnp.dot(agg, w_nei_ref[...],
                            preferred_element_type=jnp.float32)

    # Single lane-dense store once the whole source axis has been reduced.
    @pl.when(k == pl.num_programs(1) - 1)
    def _store():
        out_ref[...] = acc_ref[...]


def mamba_cell_forward(x, adj, w_self, w_nei, b_gnn, cell_bias, hidden_size,
                       *, tile_n=256, tile_k=4096):
    """MambaCell forward.

    x:         [N, F_in] float32 node features.
    adj:       [N, N] float32 dense adjacency, adj[dst, src] = edge multiplicity
               (unit edge weights, sum aggregation).  Stored as int8 in HBM by
               this wrapper, so multiplicities must be <= 127.
    w_self:    [F_in, 2H] GraphConv root weight.
    w_nei:     [F_in, 2H] GraphConv neighbor weight.
    b_gnn:     [2H] (or [1, 2H]) GraphConv bias.
    cell_bias: [2H] (or [1, 2H]) MambaCell bias.
    Returns (wrx + br, wzx + bz), each [N, H] float32.
    """
    N, f_in = x.shape
    two_h = 2 * hidden_size
    two_h_pad = _round_up(two_h, 128)          # lane-dense output / weight cols

    # ---- wrapper-side constants (done once, outside the kernel) -------------
    bias = (jnp.reshape(b_gnn, (1, two_h)) +
            jnp.reshape(cell_bias, (1, two_h))).astype(jnp.float32)
    w_self_p = w_self.astype(jnp.float32)
    w_nei_p = w_nei.astype(jnp.float32)
    if two_h_pad != two_h:
        pad = ((0, 0), (0, two_h_pad - two_h))
        w_self_p = jnp.pad(w_self_p, pad)
        w_nei_p = jnp.pad(w_nei_p, pad)
        bias = jnp.pad(bias, pad)

    # ---- tile sizes ----------------------------------------------------------
    # Rows: multiple of 32 (safe for the int8 adjacency sublane packing).
    # Source axis: multiple of 128 (lane dim of the adjacency block).
    tile_n = max(32, min(_round_up(tile_n, 32), _round_up(N, 32)))
    tile_k = max(128, min(_round_up(tile_k, 128), _round_up(N, 128)))
    n_rows = _round_up(N, tile_n)              # destination (row) padding
    n_cols = _round_up(N, tile_k)              # source (reduction) padding

    # ---- padded operands -----------------------------------------------------
    x_row = jnp.pad(x.astype(jnp.float32), ((0, n_rows - N), (0, 0)))
    x_src = jnp.pad(x.astype(jnp.bfloat16), ((0, n_cols - N), (0, 0)))
    # int8 adjacency in HBM: the dominant O(N^2) stream (exact for counts<=127).
    adj_i8 = jnp.pad(jnp.rint(adj).astype(jnp.int8),
                     ((0, n_rows - N), (0, n_cols - N)))

    grid = (n_rows // tile_n, n_cols // tile_k)
    out = pl.pallas_call(
        _mamba_cell_kernel,
        out_shape=jax.ShapeDtypeStruct((n_rows, two_h_pad), jnp.float32),
        grid_spec=pltpu.PrefetchScalarGridSpec(
            num_scalar_prefetch=0,
            grid=grid,
            in_specs=[
                pl.BlockSpec((tile_n, f_in), lambda i, k: (i, 0)),     # x row tile (f32)
                pl.BlockSpec((tile_k, f_in), lambda i, k: (k, 0)),     # x source block (bf16)
                pl.BlockSpec((tile_n, tile_k), lambda i, k: (i, k)),   # adj block (int8)
                pl.BlockSpec((f_in, two_h_pad), lambda i, k: (0, 0)),  # W_self (invariant)
                pl.BlockSpec((f_in, two_h_pad), lambda i, k: (0, 0)),  # W_nei (invariant)
                pl.BlockSpec((1, two_h_pad), lambda i, k: (0, 0)),     # fused bias
            ],
            out_specs=pl.BlockSpec((tile_n, two_h_pad), lambda i, k: (i, 0)),
            scratch_shapes=[pltpu.VMEM((tile_n, two_h_pad), jnp.float32)],
        ),
        compiler_params=pltpu.CompilerParams(
            dimension_semantics=("parallel", "arbitrary"),
            vmem_limit_bytes=32 * 1024 * 1024,
        ),
    )(x_row, x_src, adj_i8, w_self_p, w_nei_p, bias)

    out = out[:N, :two_h]                      # strip row / lane padding (XLA)
    return out[:, :hidden_size], out[:, hidden_size:]


def xavier_uniform(key, shape):
    fan_in, fan_out = shape[0], shape[1]
    a = math.sqrt(6.0 / (fan_in + fan_out))
    return jax.random.uniform(key, shape, jnp.float32, -a, a)


if __name__ == "__main__":
    # Small deterministic example consistent with the module defaults
    # (input_size=8, hidden_size=64 -> 2H = 128, exactly lane-dense).
    N = 200           # number of graph nodes
    F_IN = 8          # input_size
    H = 64            # hidden_size
    E = 400           # number of edges

    key = jax.random.PRNGKey(0)
    k_x, k_e, k_ws, k_wn, k_bg, k_cb = jax.random.split(key, 6)

    x = jax.random.normal(k_x, (N, F_IN), jnp.float32)
    edge_index = jax.random.randint(k_e, (2, E), 0, N)    # [2, E] (src, dst)

    # Parameters (reset_parameters: xavier_uniform for dim>1, uniform(-std,std) dim==1).
    std = 1.0 / math.sqrt(H)
    w_self = xavier_uniform(k_ws, (F_IN, 2 * H))
    w_nei = xavier_uniform(k_wn, (F_IN, 2 * H))
    b_gnn = jax.random.uniform(k_bg, (2 * H,), jnp.float32, -std, std)
    cell_bias = jax.random.uniform(k_cb, (2 * H,), jnp.float32, -std, std)

    # Glue: dense adjacency from edge_index (sum aggregation, messages src->dst).
    src, dst = edge_index[0], edge_index[1]
    adj = jnp.zeros((N, N), jnp.float32).at[dst, src].add(1.0)

    # Small tiles so both grid axes actually iterate:
    #   rows: ceil(200/64)=4 parallel steps, source: ceil(200/128)=2 reduction steps.
    # (Real workloads should keep the defaults tile_n=256, tile_k=4096.)
    wrx, wzx = mamba_cell_forward(x, adj, w_self, w_nei, b_gnn, cell_bias, H,
                                  tile_n=64, tile_k=128)
    jax.block_until_ready((wrx, wzx))
    assert wrx.shape == (N, H) and wzx.shape == (N, H)

    bias_full = b_gnn + cell_bias

    # Reference 1: mimic the kernel arithmetic (x quantized to bf16 only on the
    # aggregation path; everything else f32) — tight check.
    x_bf = x.astype(jnp.bfloat16).astype(jnp.float32)
    agg = adj @ x_bf
    ref_mix = x @ w_self + agg @ w_nei + bias_full
    assert jnp.allclose(wrx, ref_mix[:, :H], atol=1e-3), "wrx mismatch (kernel-arith ref)"
    assert jnp.allclose(wzx, ref_mix[:, H:], atol=1e-3), "wzx mismatch (kernel-arith ref)"

    # Reference 2: pure f32 module semantics (loose: bf16 x on the aggregation path).
    ref_f32 = x @ w_self + (adj @ x) @ w_nei + bias_full
    assert jnp.allclose(wrx, ref_f32[:, :H], atol=5e-2), "wrx mismatch (f32 ref)"
    assert jnp.allclose(wzx, ref_f32[:, H:], atol=5e-2), "wzx mismatch (f32 ref)"

    print("KERNEL_OK")
</pallas_src>

<mosaic_0001>
module attributes {stable_mosaic.version = 11 : i64} {
  func.func @_mamba_cell_kernel(%arg0: i32, %arg1: i32, %arg2: memref<64x8xf32, #tpu.memory_space<vmem>>, %arg3: memref<128x8xbf16, #tpu.memory_space<vmem>>, %arg4: memref<64x128xi8, #tpu.memory_space<vmem>>, %arg5: memref<8x128xf32, #tpu.memory_space<vmem>>, %arg6: memref<8x128xf32, #tpu.memory_space<vmem>>, %arg7: memref<1x128xf32, #tpu.memory_space<vmem>>, %arg8: memref<64x128xf32, #tpu.memory_space<vmem>>, %arg9: memref<64x128xf32, #tpu.memory_space<vmem>>) attributes {dimension_semantics = [#tpu.dimension_semantics<parallel>, #tpu.dimension_semantics<arbitrary>], iteration_bounds = array<i64: 4, 2>, scalar_prefetch = 0 : i64, scratch_operands = 1 : i64, tpu.core_type = #tpu.core_type<tc>, window_params = [{transform_indices = @transform_0, window_bounds = array<i64: 64, 8>}, {transform_indices = @transform_1, window_bounds = array<i64: 128, 8>}, {transform_indices = @transform_2, window_bounds = array<i64: 64, 128>}, {pipeline_mode = #tpu.pipeline_mode<synchronous>, transform_indices = @transform_3, window_bounds = array<i64: 8, 128>}, {pipeline_mode = #tpu.pipeline_mode<synchronous>, transform_indices = @transform_4, window_bounds = array<i64: 8, 128>}, {pipeline_mode = #tpu.pipeline_mode<synchronous>, transform_indices = @transform_5, window_bounds = array<i64: 1, 128>}, {transform_indices = @transform_6, window_bounds = array<i64: 64, 128>}]} {
    %c0_i32 = arith.constant 0 : i32
    %0 = arith.cmpi eq, %arg1, %c0_i32 : i32
    %1 = arith.extui %0 : i1 to i32
    %c0_i32_0 = arith.constant 0 : i32
    %2 = arith.cmpi ne, %1, %c0_i32_0 : i32
    scf.if %2 {
      %c0_12 = arith.constant 0 : index
      %c0_13 = arith.constant 0 : index
      %17 = vector.load %arg2[%c0_12, %c0_13] : memref<64x8xf32, #tpu.memory_space<vmem>>, vector<64x8xf32>
      %c0_14 = arith.constant 0 : index
      %c0_15 = arith.constant 0 : index
      %18 = vector.load %arg5[%c0_14, %c0_15] : memref<8x128xf32, #tpu.memory_space<vmem>>, vector<8x128xf32>
      %cst_16 = arith.constant dense<0.000000e+00> : vector<64x128xf32>
      %19 = tpu.matmul %17, %18, %cst_16 {dimension_numbers = #tpu.dot_dimension_numbers<[1], [0], [0], [1], [0, 0, 1, 1], [], []>} : vector<64x8xf32>, vector<8x128xf32>, vector<64x128xf32> -> vector<64x128xf32>
      %c0_17 = arith.constant 0 : index
      %c0_18 = arith.constant 0 : index
      %20 = vector.load %arg7[%c0_17, %c0_18] : memref<1x128xf32, #tpu.memory_space<vmem>>, vector<1x128xf32>
      %21 = vector.broadcast %20 : vector<1x128xf32> to vector<64x128xf32>
      %22 = arith.addf %19, %21 : vector<64x128xf32>
      %c0_19 = arith.constant 0 : index
      %c0_20 = arith.constant 0 : index
      %23 = vector.load %arg9[%c0_19, %c0_20] : memref<64x128xf32, #tpu.memory_space<vmem>>, vector<64x128xf32>
      tpu.vector_store %arg9[%c0_19, %c0_20], %22 {strides = array<i32>} : memref<64x128xf32, #tpu.memory_space<vmem>>, vector<64x128xf32>,
    } else {
    }
    %c0 = arith.constant 0 : index
    %c0_1 = arith.constant 0 : index
    %3 = vector.load %arg4[%c0, %c0_1] : memref<64x128xi8, #tpu.memory_space<vmem>>, vector<64x128xi8>
    %4 = arith.extsi %3 : vector<64x128xi8> to vector<64x128xi32>
    %5 = arith.sitofp %4 : vector<64x128xi32> to vector<64x128xf32>
    %6 = arith.truncf %5 : vector<64x128xf32> to vector<64x128xbf16>
    %c0_2 = arith.constant 0 : index
    %c0_3 = arith.constant 0 : index
    %7 = vector.load %arg3[%c0_2, %c0_3] : memref<128x8xbf16, #tpu.memory_space<vmem>>, vector<128x8xbf16>
    %cst = arith.constant dense<0.000000e+00> : vector<64x8xf32>
    %8 = tpu.matmul %6, %7, %cst {dimension_numbers = #tpu.dot_dimension_numbers<[1], [0], [0], [1], [0, 0, 1, 1], [], []>} : vector<64x128xbf16>, vector<128x8xbf16>, vector<64x8xf32> -> vector<64x8xf32>
    %c0_4 = arith.constant 0 : index
    %c0_5 = arith.constant 0 : index
    %9 = vector.load %arg9[%c0_4, %c0_5] : memref<64x128xf32, #tpu.memory_space<vmem>>, vector<64x128xf32>
    %c0_6 = arith.constant 0 : index
    %c0_7 = arith.constant 0 : index
    %10 = vector.load %arg6[%c0_6, %c0_7] : memref<8x128xf32, #tpu.memory_space<vmem>>, vector<8x128xf32>
    %cst_8 = arith.constant dense<0.000000e+00> : vector<64x128xf32>
    %11 = tpu.matmul %8, %10, %cst_8 {dimension_numbers = #tpu.dot_dimension_numbers<[1], [0], [0], [1], [0, 0, 1, 1], [], []>} : vector<64x8xf32>, vector<8x128xf32>, vector<64x128xf32> -> vector<64x128xf32>
    %12 = arith.addf %9, %11 : vector<64x128xf32>
    %c0_9 = arith.constant 0 : index
    %c0_10 = arith.constant 0 : index
    %13 = vector.load %arg9[%c0_9, %c0_10] : memref<64x128xf32, #tpu.memory_space<vmem>>, vector<64x128xf32>
    tpu.vector_store %arg9[%c0_9, %c0_10], %12 {strides = array<i32>} : memref<64x128xf32, #tpu.memory_space<vmem>>, vector<64x128xf32>,
    %c1_i32 = arith.constant 1 : i32
    %14 = arith.cmpi eq, %arg1, %c1_i32 : i32
    %15 = arith.extui %14 : i1 to i32
    %c0_i32_11 = arith.constant 0 : i32
    %16 = arith.cmpi ne, %15, %c0_i32_11 : i32
    scf.if %16 {
      %c0_12 = arith.constant 0 : index
      %c0_13 = arith.constant 0 : index
      %17 = vector.load %arg9[%c0_12, %c0_13] : memref<64x128xf32, #tpu.memory_space<vmem>>, vector<64x128xf32>
      %c0_14 = arith.constant 0 : index
      %c0_15 = arith.constant 0 : index
      %18 = vector.load %arg8[%c0_14, %c0_15] : memref<64x128xf32, #tpu.memory_space<vmem>>, vector<64x128xf32>
      tpu.vector_store %arg8[%c0_14, %c0_15], %17 {strides = array<i32>} : memref<64x128xf32, #tpu.memory_space<vmem>>, vector<64x128xf32>,
    } else {
    }
    return
  }
  func.func @transform_0(%arg0: i32, %arg1: i32) -> (i32, i32) {
    %c0_i32 = arith.constant 0 : i32
    %c0_i32_0 = arith.constant 0 : i32
    return %arg0, %c0_i32 : i32, i32
  }
  func.func @transform_1(%arg0: i32, %arg1: i32) -> (i32, i32) {
    %c0_i32 = arith.constant 0 : i32
    %c0_i32_0 = arith.constant 0 : i32
    return %arg1, %c0_i32 : i32, i32
  }
  func.func @transform_2(%arg0: i32, %arg1: i32) -> (i32, i32) {
    %c0_i32 = arith.constant 0 : i32
    return %arg0, %arg1 : i32, i32
  }
  func.func @transform_3(%arg0: i32, %arg1: i32) -> (i32, i32) {
    %c0_i32 = arith.constant 0 : i32
    %c0_i32_0 = arith.constant 0 : i32
    %c0_i32_1 = arith.constant 0 : i32
    return %c0_i32, %c0_i32_0 : i32, i32
  }
  func.func @transform_4(%arg0: i32, %arg1: i32) -> (i32, i32) {
    %c0_i32 = arith.constant 0 : i32
    %c0_i32_0 = arith.constant 0 : i32
    %c0_i32_1 = arith.constant 0 : i32
    return %c0_i32, %c0_i32_0 : i32, i32
  }
  func.func @transform_5(%arg0: i32, %arg1: i32) -> (i32, i32) {
    %c0_i32 = arith.constant 0 : i32
    %c0_i32_0 = arith.constant 0 : i32
    %c0_i32_1 = arith.constant 0 : i32
    return %c0_i32, %c0_i32_0 : i32, i32
  }
  func.func @transform_6(%arg0: i32, %arg1: i32) -> (i32, i32) {
    %c0_i32 = arith.constant 0 : i32
    %c0_i32_0 = arith.constant 0 : i32
    return %arg0, %c0_i32 : i32, i32
  }
}

</mosaic_0001>

<llo_original>
// kernel: tpu_custom_call.1
$region0: #{tpu_custom_call.1}
  #allocation0 [shape = 'u32[]', space=smem, size = 0x4, offset = 0x4, fixed_abs, tag = 'smem constant byte address 0x4 - core index']
  #allocation1 [shape = 'u32[144,128]{1,0:T(1,128)}', space=vmem, size = 0x12000, scoped, tag = 'internal scratch']
  #allocation2 [shape = 'f32[64,128]{1,0:T(8,128)}', space=vmem, size = 0x8000, scoped, tag = 'scratch operand']
  %s0 = inlined_call_operand.vmem [shape: f32[256,8], index: 0, kind: input, shape index: {}]
  %s1 = inlined_call_operand.vmem [shape: bf16[256,8], index: 1, kind: input, shape index: {}]
  %s2 = inlined_call_operand.vmem [shape: s8[256,256], index: 2, kind: input, shape index: {}]
  %s3 = inlined_call_operand.vmem [shape: f32[8,128], index: 3, kind: input, shape index: {}]
  %s4 = inlined_call_operand.vmem [shape: f32[8,128], index: 4, kind: input, shape index: {}]
  %s5 = inlined_call_operand.vmem [shape: f32[1,128], index: 5, kind: input, shape index: {}]
  %s6 = inlined_call_operand.hbm [shape: f32[256,128], index: 6, kind: output, shape index: {}]
  %s7 = sld [smem:[#allocation0]]
  $region103: #{tpu_custom_call.1} parent=0
    _
  %s9 = ssub.s32 1, %s7
  %s10 = scalar_select 0, %s9, %s7
  $region1: #{tpu_custom_call.1} parent=0
    #allocation3 [shape = 'u8[16384]{0}', space=vmem, size = 0x4000, scoped, tag = 'input window, operand 2']
    #allocation4 [shape = 'u8[65536]{0}', space=vmem, size = 0x10000, scoped, tag = 'output window, operand 0']
    #allocation5 [shape = 's32[2]{0}', space=sflag, size = 0x8, scoped, tag = 'scoped memory for tpu_custom_call.1']
    %11 = vsyncpa [#allocation5], 0
    %s12 = scalar_lea.sflag [#allocation5], 1
    %13 = vsyncpa %s12, 0
    loop: start=0, step=1, limit=10
    $region2: #{tpu_custom_call.1} parent=1 // loop_pre_header
      _
    $region3: #{tpu_custom_call.1} parent=1 // loop_header
      %s15 = sphi 0, %s19
      %p16 = scmp.ge.s32.totalorder %s15, 10
      %s22 = sphi 0, %s34
      %s23 = sphi 0, %s30
      %s24 = sphi 0, %s22
      %s25 = sphi 0, %s23
      %s26 = sphi 0, %s24
      %s27 = sphi 0, %s25
      %s37 = sphi 0, %s39
      %s40 = sphi 0, %s37
      %s41 = sphi 0, %s40
      %s57 = sphi 0, %s41
      %s63 = sphi 0, %s65
      %s66 = sphi 0, %s63
      %s67 = sphi 0, %s66
      %s83 = sphi 0, %s67
      %s91 = sphi 0, %s93
      %s94 = sphi 0, %s91
      %s95 = sphi 0, %s94
      %s111 = sphi 0, %s95
      %s115 = sphi 0, %s115
      %s117 = sphi 0, %s115
      %s118 = sphi 0, %s117
      %s132 = sphi 0, %s118
      %s136 = sphi 0, %s136
      %s138 = sphi 0, %s136
      %s139 = sphi 0, %s138
      %s153 = sphi 0, %s139
      %s157 = sphi 0, %s157
      %s159 = sphi 0, %s157
      %s160 = sphi 0, %s159
      %s174 = sphi 0, %s160
      %s180 = sphi 0, %s182
      %s183 = sphi 0, %s180
      %s184 = sphi 0, %s183
      %s200 = sphi 0, %s184
    $region4: #{tpu_custom_call.1} parent=1 // loop_header_branch
      %18 = sbr.rel (%p16) target = $region8
    $region5: #{tpu_custom_call.1} parent=1 // loop_body
      %s20 = ssub.s32 %s15, 1
      %s21 = ssub.s32 %s15, 2
      %s28 = sadd.s32 1, %s23
      %p29 = scmp.ge.s32.totalorder %s28, 2
      %s30 = scalar_select %p29, 0, %s28
      %s31 = sadd.s32 1, %s22
      %s32 = scalar_select %p29, %s31, %s22
      %p33 = scmp.ge.s32.totalorder %s32, 4
      %s34 = scalar_select %p33, 0, %s32
      %s35 = ssub.s32 %s22, %s34
      %p36 = scmp.eq.s32.totalorder %s35, 0
      %s38 = sadd.s32 %s37, 1
      %s39 = scalar_select %p36, %s37, %s38
      %p42 = pneg %p36
      %p43 = scmp.eq.s32.totalorder %s15, 7
      %p44 = por %p42, %p43
      %p45 = scmp.ne.s32.totalorder %s37, %s40
      %p46 = scmp.eq.s32.totalorder %s15, 0
      %p47 = por %p45, %p46
      %p48 = scmp.ne.s32.totalorder %s37, %s40
      %p49 = scmp.eq.s32.totalorder %s20, 7
      %p50 = por %p48, %p49
      %p51 = scmp.ne.s32.totalorder %s40, %s41
      %p52 = scmp.eq.s32.totalorder %s20, 0
      %p53 = por %p51, %p52
      %p54 = scmp.ne.s32.totalorder %s40, %s41
      %p55 = scmp.eq.s32.totalorder %s21, 7
      %p56 = por %p54, %p55
      %p58 = scmp.ne.s32.totalorder %s41, %s57
      %p59 = scmp.eq.s32.totalorder %s21, 0
      %p60 = por %p58, %p59
      %s61 = ssub.s32 %s23, %s30
      %p62 = scmp.eq.s32.totalorder %s61, 0
      %s64 = sadd.s32 %s63, 1
      %s65 = scalar_select %p62, %s63, %s64
      %p68 = pneg %p62
      %p69 = scmp.eq.s32.totalorder %s15, 7
      %p70 = por %p68, %p69
      %p71 = scmp.ne.s32.totalorder %s63, %s66
      %p72 = scmp.eq.s32.totalorder %s15, 0
      %p73 = por %p71, %p72
      %p74 = scmp.ne.s32.totalorder %s63, %s66
      %p75 = scmp.eq.s32.totalorder %s20, 7
      %p76 = por %p74, %p75
      %p77 = scmp.ne.s32.totalorder %s66, %s67
      %p78 = scmp.eq.s32.totalorder %s20, 0
      %p79 = por %p77, %p78
      %p80 = scmp.ne.s32.totalorder %s66, %s67
      %p81 = scmp.eq.s32.totalorder %s21, 7
      %p82 = por %p80, %p81
      %p84 = scmp.ne.s32.totalorder %s67, %s83
      %p85 = scmp.eq.s32.totalorder %s21, 0
      %p86 = por %p84, %p85
      %s87 = ssub.s32 %s22, %s34
      %s88 = ssub.s32 %s23, %s30
      %s89 = sor.u32 %s87, %s88
      %p90 = scmp.eq.s32.totalorder %s89, 0
      %s92 = sadd.s32 %s91, 1
      %s93 = scalar_select %p90, %s91, %s92
      %p96 = pneg %p90
      %p97 = scmp.eq.s32.totalorder %s15, 7
      %p98 = por %p96, %p97
      %p99 = scmp.ne.s32.totalorder %s91, %s94
      %p100 = scmp.eq.s32.totalorder %s15, 0
      %p101 = por %p99, %p100
      %p102 = scmp.ne.s32.totalorder %s91, %s94
      %p103 = scmp.eq.s32.totalorder %s20, 7
      %p104 = por %p102, %p103
      %p105 = scmp.ne.s32.totalorder %s94, %s95
      %p106 = scmp.eq.s32.totalorder %s20, 0
      %p107 = por %p105, %p106
      %p108 = scmp.ne.s32.totalorder %s94, %s95
      %p109 = scmp.eq.s32.totalorder %s21, 7
      %p110 = por %p108, %p109
      %p112 = scmp.ne.s32.totalorder %s95, %s111
      %p113 = scmp.eq.s32.totalorder %s21, 0
      %p114 = por %p112, %p113
      %s116 = sadd.s32 %s115, 1
      %p119 = scmp.eq.s32.totalorder %s15, 7
      %p120 = scmp.ne.s32.totalorder %s115, %s117
      %p121 = scmp.eq.s32.totalorder %s15, 0
      %p122 = por %p120, %p121
      %p123 = scmp.ne.s32.totalorder %s115, %s117
      %p124 = scmp.eq.s32.totalorder %s20, 7
      %p125 = por %p123, %p124
      %p126 = scmp.ne.s32.totalorder %s117, %s118
      %p127 = scmp.eq.s32.totalorder %s20, 0
      %p128 = por %p126, %p127
      %p129 = scmp.ne.s32.totalorder %s117, %s118
      %p130 = scmp.eq.s32.totalorder %s21, 7
      %p131 = por %p129, %p130
      %p133 = scmp.ne.s32.totalorder %s118, %s132
      %p134 = scmp.eq.s32.totalorder %s21, 0
      %p135 = por %p133, %p134
      %s137 = sadd.s32 %s136, 1
      %p140 = scmp.eq.s32.totalorder %s15, 7
      %p141 = scmp.ne.s32.totalorder %s136, %s138
      %p142 = scmp.eq.s32.totalorder %s15, 0
      %p143 = por %p141, %p142
      %p144 = scmp.ne.s32.totalorder %s136, %s138
      %p145 = scmp.eq.s32.totalorder %s20, 7
      %p146 = por %p144, %p145
      %p147 = scmp.ne.s32.totalorder %s138, %s139
      %p148 = scmp.eq.s32.totalorder %s20, 0
      %p149 = por %p147, %p148
      %p150 = scmp.ne.s32.totalorder %s138, %s139
      %p151 = scmp.eq.s32.totalorder %s21, 7
      %p152 = por %p150, %p151
      %p154 = scmp.ne.s32.totalorder %s139, %s153
      %p155 = scmp.eq.s32.totalorder %s21, 0
      %p156 = por %p154, %p155
      %s158 = sadd.s32 %s157, 1
      %p161 = scmp.eq.s32.totalorder %s15, 7
      %p162 = scmp.ne.s32.totalorder %s157, %s159
      %p163 = scmp.eq.s32.totalorder %s15, 0
      %p164 = por %p162, %p163
      %p165 = scmp.ne.s32.totalorder %s157, %s159
      %p166 = scmp.eq.s32.totalorder %s20, 7
      %p167 = por %p165, %p166
      %p168 = scmp.ne.s32.totalorder %s159, %s160
      %p169 = scmp.eq.s32.totalorder %s20, 0
      %p170 = por %p168, %p169
      %p171 = scmp.ne.s32.totalorder %s159, %s160
      %p172 = scmp.eq.s32.totalorder %s21, 7
      %p173 = por %p171, %p172
      %p175 = scmp.ne.s32.totalorder %s160, %s174
      %p176 = scmp.eq.s32.totalorder %s21, 0
      %p177 = por %p175, %p176
      %s178 = ssub.s32 %s22, %s34
      %p179 = scmp.eq.s32.totalorder %s178, 0
      %s181 = sadd.s32 %s180, 1
      %s182 = scalar_select %p179, %s180, %s181
      %p185 = pneg %p179
      %p186 = scmp.eq.s32.totalorder %s15, 7
      %p187 = por %p185, %p186
      %p188 = scmp.ne.s32.totalorder %s180, %s183
      %p189 = scmp.eq.s32.totalorder %s15, 0
      %p190 = por %p188, %p189
      %p191 = scmp.ne.s32.totalorder %s180, %s183
      %p192 = scmp.eq.s32.totalorder %s20, 7
      %p193 = por %p191, %p192
      %p194 = scmp.ne.s32.totalorder %s183, %s184
      %p195 = scmp.eq.s32.totalorder %s20, 0
      %p196 = por %p194, %p195
      %p197 = scmp.ne.s32.totalorder %s183, %s184
      %p198 = scmp.eq.s32.totalorder %s21, 7
      %p199 = por %p197, %p198
      %p201 = scmp.ne.s32.totalorder %s184, %s200
      %p202 = scmp.eq.s32.totalorder %s21, 0
      %p203 = por %p201, %p202
      %p204 = scmp.le.s32.totalorder 1, %s15
      %p205 = scmp.lt.s32.totalorder %s15, 9
      %p206 = pnand %p204, %p205
      %p207 = pneg %p206
      // Predicated region
      $region9: #{tpu_custom_call.1} parent=5 // pred_check
        _
      $region10: #{tpu_custom_call.1} parent=5 // pred_check_branch
        %209 = sbr.rel (%p206) target = $region12
      $region11: #{tpu_custom_call.1} parent=5 // pred_region
        %s210 = ssub.s32 %s15, 1
        // Predicated region
        $region13: #{tpu_custom_call.1} parent=11 // pred_check
          %p211 = pneg %p128
        $region14: #{tpu_custom_call.1} parent=11 // pred_check_branch
          %213 = sbr.rel (%p211) target = $region16
        $region15: #{tpu_custom_call.1} parent=11 // pred_region
          _
        $region16: #{tpu_custom_call.1} parent=11 // pred_fallthru
          _
        // Predicated region
        $region17: #{tpu_custom_call.1} parent=11 // pred_check
          %p214 = pneg %p149
        $region18: #{tpu_custom_call.1} parent=11 // pred_check_branch
          %216 = sbr.rel (%p214) target = $region20
        $region19: #{tpu_custom_call.1} parent=11 // pred_region
          _
        $region20: #{tpu_custom_call.1} parent=11 // pred_fallthru
          _
        // Predicated region
        $region21: #{tpu_custom_call.1} parent=11 // pred_check
          %p217 = pneg %p170
        $region22: #{tpu_custom_call.1} parent=11 // pred_check_branch
          %219 = sbr.rel (%p217) target = $region24
        $region23: #{tpu_custom_call.1} parent=11 // pred_region
          _
        $region24: #{tpu_custom_call.1} parent=11 // pred_fallthru
          _
      $region12: #{tpu_custom_call.1} parent=5 // pred_fallthru
        _
      %p220 = scmp.lt.s32.totalorder %s15, 8
      // Predicated region
      $region25: #{tpu_custom_call.1} parent=5 // pred_check
        %p221 = pneg %p220
      $region26: #{tpu_custom_call.1} parent=5 // pred_check_branch
        %223 = sbr.rel (%p221) target = $region28
      $region27: #{tpu_custom_call.1} parent=5 // pred_region
        // Predicated region
        $region29: #{tpu_custom_call.1} parent=27 // pred_check
          %p224 = pneg %p47
        $region30: #{tpu_custom_call.1} parent=27 // pred_check_branch
          %226 = sbr.rel (%p224) target = $region32
        $region31: #{tpu_custom_call.1} parent=27 // pred_region
          %s227 = smul.u32 8, %s22
          %p228 = scmp.lt.s32.totalorder %s227, 31
          %s229 = scalar_select %p228, %s227, 31
          %s230 = smul.addr %s229, 8
          %s231 = scalar_lea.vmem %s0, %s230
          %s232 = smul.u32 8, %s22
        $region32: #{tpu_custom_call.1} parent=27 // pred_fallthru
          _
        // Predicated region
        $region33: #{tpu_custom_call.1} parent=27 // pred_check
          %p233 = pneg %p73
        $region34: #{tpu_custom_call.1} parent=27 // pred_check_branch
          %235 = sbr.rel (%p233) target = $region36
        $region35: #{tpu_custom_call.1} parent=27 // pred_region
          %s236 = smul.u32 16, %s23
          %p237 = scmp.lt.s32.totalorder %s236, 31
          %s238 = scalar_select %p237, %s236, 31
          %s239 = smul.addr %s238, 4
          %s240 = scalar_lea.vmem %s1, %s239
          %s241 = smul.u32 16, %s23
        $region36: #{tpu_custom_call.1} parent=27 // pred_fallthru
          _
        // Predicated region
        $region37: #{tpu_custom_call.1} parent=27 // pred_check
          %p242 = pneg %p101
        $region38: #{tpu_custom_call.1} parent=27 // pred_check_branch
          %244 = sbr.rel (%p242) target = $region40
        $region39: #{tpu_custom_call.1} parent=27 // pred_region
          %s245 = sand.u32 %s91, 1
          %s246 = sand.u32 %s91, 1
          %s247 = smul.addr %s246, 16
          %s248 = scalar_lea.vmem [#allocation3], %s247
          %s249 = smul.u32 2, %s22
          %s250 = smul.addr %s249, 2
          %s251 = sadd.s32 %s23, %s250
          %s252 = smul.addr %s251, 8
          %s253 = scalar_lea.vmem %s2, %s252
          // Predicated region
          $region41: #{tpu_custom_call.1} parent=39 // pred_check
            _
          $region42: #{tpu_custom_call.1} parent=39 // pred_check_branch
            %255 = sbr.rel (0) target = $region44
          $region43: #{tpu_custom_call.1} parent=39 // pred_region
            // Predicated region
            $region45: #{tpu_custom_call.1} parent=43 // pred_check
              _
            $region46: #{tpu_custom_call.1} parent=43 // pred_check_branch
              %257 = sbr.rel (0) target = $region48
            $region47: #{tpu_custom_call.1} parent=43 // pred_region
              // Predicated region
              $region60: #{tpu_custom_call.1} parent=47 // pred_check
                _
              $region61: #{tpu_custom_call.1} parent=47 // pred_check_branch
                %274 = sbr.rel (0) target = $region63
              $region62: #{tpu_custom_call.1} parent=47 // pred_region
                loop: start=0, step=1, limit=1
                $region64: #{tpu_custom_call.1} parent=62 // loop_pre_header
                  _
                $region65: #{tpu_custom_call.1} parent=62 // loop_header
                  %s276 = sphi 0, %s280
                  %p277 = scmp.ge.s32.totalorder %s276, 1
                  %s281 = sphi %s253, %s253
                  %s282 = sphi %s248, %s248
                $region66: #{tpu_custom_call.1} parent=62 // loop_header_branch
                  %279 = sbr.rel (%p277) target = $region70
                $region67: #{tpu_custom_call.1} parent=62 // loop_body
                  %v283 = vld [vmem:[%s281] sm:$0xff]
                  %284 = vst [vmem:[%s282] sm:$0xff] %v283
                  %v285 = vld [vmem:[%s281 + $0x10] sm:$0xff]
                  %286 = vst [vmem:[%s282 + $0x8] sm:$0xff] %v285
                $region68: #{tpu_custom_call.1} parent=62 // loop_footer
                  %s280 = sadd.s32 1, %s276
                $region69: #{tpu_custom_call.1} parent=62 // loop_footer_branch
                  %275 = sbr.rel target = $region65
                $region70: #{tpu_custom_call.1} parent=62 // loop_exit
                  _
              $region63: #{tpu_custom_call.1} parent=47 // pred_fallthru
                _
              // Predicated region
              $region71: #{tpu_custom_call.1} parent=47 // pred_check
                _
              $region72: #{tpu_custom_call.1} parent=47 // pred_check_branch
                %288 = sbr.rel target = $region74
              $region73: #{tpu_custom_call.1} parent=47 // pred_region
                _
              $region74: #{tpu_custom_call.1} parent=47 // pred_fallthru
                _
            $region48: #{tpu_custom_call.1} parent=43 // pred_fallthru
              _
            // Predicated region
            $region49: #{tpu_custom_call.1} parent=43 // pred_check
              _
            $region50: #{tpu_custom_call.1} parent=43 // pred_check_branch
              %259 = sbr.rel target = $region52
            $region51: #{tpu_custom_call.1} parent=43 // pred_region
              loop: start=0, step=1, limit=1
              $region53: #{tpu_custom_call.1} parent=51 // loop_pre_header
                _
              $region54: #{tpu_custom_call.1} parent=51 // loop_header
                %s262 = sphi 0, %s266
                %p263 = scmp.ge.s32.totalorder %s262, 1
                %s267 = sphi %s253, %s253
                %s268 = sphi %s248, %s248
              $region55: #{tpu_custom_call.1} parent=51 // loop_header_branch
                %265 = sbr.rel (%p263) target = $region59
              $region56: #{tpu_custom_call.1} parent=51 // loop_body
                %v269 = vld [vmem:[%s267] sm:$0xff]
                %270 = vst [vmem:[%s268] sm:$0xff] %v269
                %v271 = vld [vmem:[%s267 + $0x10] sm:$0xff]
                %272 = vst [vmem:[%s268 + $0x8] sm:$0xff] %v271
              $region57: #{tpu_custom_call.1} parent=51 // loop_footer
                %s266 = sadd.s32 1, %s262
              $region58: #{tpu_custom_call.1} parent=51 // loop_footer_branch
                %261 = sbr.rel target = $region54
              $region59: #{tpu_custom_call.1} parent=51 // loop_exit
                _
            $region52: #{tpu_custom_call.1} parent=43 // pred_fallthru
              _
          $region44: #{tpu_custom_call.1} parent=39 // pred_fallthru
            _
          %289 = vnop
        $region40: #{tpu_custom_call.1} parent=27 // pred_fallthru
          _
      $region28: #{tpu_custom_call.1} parent=5 // pred_fallthru
        _
      %p290 = scmp.le.s32.totalorder 1, %s15
      %p291 = scmp.lt.s32.totalorder %s15, 9
      %p292 = pnand %p290, %p291
      %p293 = pneg %p292
      // Predicated region
      $region75: #{tpu_custom_call.1} parent=5 // pred_check
        _
      $region76: #{tpu_custom_call.1} parent=5 // pred_check_branch
        %295 = sbr.rel (%p292) target = $region78
      $region77: #{tpu_custom_call.1} parent=5 // pred_region
        %s296 = ssub.s32 %s15, 1
        %s297 = sand.u32 %s94, 1
        %s298 = sand.u32 %s94, 1
        %s299 = smul.addr %s298, 16
        %s300 = scalar_lea.vmem [#allocation3], %s299
        // Predicated region
        $region79: #{tpu_custom_call.1} parent=77 // pred_check
          %p301 = pneg %p107
        $region80: #{tpu_custom_call.1} parent=77 // pred_check_branch
          %303 = sbr.rel (%p301) target = $region82
        $region81: #{tpu_custom_call.1} parent=77 // pred_region
          _
        $region82: #{tpu_custom_call.1} parent=77 // pred_fallthru
          _
        %s304 = smul.u32 8, %s24
        %p305 = scmp.lt.s32.totalorder %s304, 31
        %s306 = scalar_select %p305, %s304, 31
        %s307 = smul.addr %s306, 8
        %s308 = scalar_lea.vmem %s0, %s307
        %p309 = pneg %p53
        %p310 = pneg %p50
        %s311 = smul.u32 16, %s25
        %p312 = scmp.lt.s32.totalorder %s311, 31
        %s313 = scalar_select %p312, %s311, 31
        %s314 = smul.addr %s313, 4
        %s315 = scalar_lea.vmem %s1, %s314
        %p316 = pneg %p79
        %p317 = pneg %p76
        %s318 = sand.u32 %s94, 1
        %s319 = sand.u32 %s94, 1
        %s320 = smul.addr %s319, 16
        %s321 = scalar_lea.vmem [#allocation3], %s320
        %p322 = pneg %p107
        %p323 = pneg %p104
        %p324 = pneg %p128
        %p325 = pneg %p125
        %p326 = pneg %p149
        %p327 = pneg %p146
        %p328 = pneg %p170
        %p329 = pneg %p167
        %p330 = pneg %p196
        %p331 = pneg %p193
        %s332 = sand.u32 %s183, 1
        %s333 = scalar_lea.sflag [#allocation5], %s332
        %s334 = sand.u32 %s183, 1
        %s335 = smul.addr %s334, 64
        %s336 = scalar_lea.vmem [#allocation4], %s335
        %s337 = smul.u32 8, %s24
        %p338 = scmp.lt.s32.totalorder %s337, 31
        %s339 = scalar_select %p338, %s337, 31
        %s340 = smul.addr %s339, 8
        %s341 = scalar_lea.vmem %s0, %s340
        %s342 = smul.u32 8, %s24
        %s343 = smul.u32 16, %s25
        %p344 = scmp.lt.s32.totalorder %s343, 31
        %s345 = scalar_select %p344, %s343, 31
        %s346 = smul.addr %s345, 4
        %s347 = scalar_lea.vmem %s1, %s346
        %s348 = smul.u32 16, %s25
        %s349 = smul.u32 2, %s24
        %s350 = smul.u32 8, %s24
        %p352 = scmp.eq.s32.totalorder %s25, 0
        // Predicated region
        $region83: #{tpu_custom_call.1} parent=77 // pred_check
          %p353 = pneg %p352
        $region84: #{tpu_custom_call.1} parent=77 // pred_check_branch
          %355 = sbr.rel (%p353) target = $region86
        $region85: #{tpu_custom_call.1} parent=77 // pred_region
          %v356 = vld [vmem:[%s341] sm:$0xff]
          %v357 = vld [vmem:[%s341 + $0x8] sm:$0xff]
          %v358 = vld [vmem:[%s341 + $0x10] sm:$0xff]
          %v359 = vld [vmem:[%s341 + $0x18] sm:$0xff]
          %v360 = vld [vmem:[%s341 + $0x20] sm:$0xff]
          %v361 = vld [vmem:[%s341 + $0x28] sm:$0xff]
          %v362 = vld [vmem:[%s341 + $0x30] sm:$0xff]
          %v363 = vld [vmem:[%s341 + $0x38] sm:$0xff]
          %v364 = vld [vmem:[%s3] sm:$0xff]
          %v365 = vld [vmem:[%s5] sm:$0x1]
          %v367 = vlaneseq
          %v368 = vshrl.u32 %v367, 7
          %v369 = vsub.s32 0, %v368
          %v370 = vrot.slane %v365, %v369
          %vm372 = vcmask 64512
          %v374 = vsel %vm372, %v356, 0
          %v377 = vsel %vm372, %v357, 0
          %v380 = vsel %vm372, %v358, 0
          %v383 = vsel %vm372, %v359, 0
          %v386 = vsel %vm372, %v360, 0
          %v389 = vsel %vm372, %v361, 0
          %v392 = vsel %vm372, %v362, 0
          %v395 = vsel %vm372, %v363, 0
          %397 = vmatprep.subr.mxu0 0.0
          %398 = vmatpush1.msra.mxu0 %v364
          %399 = vmatprep.subr.mxu0 0.0
          %400 = vmatpush1.msra.mxu0 0.0
          %401 = vmatprep.subr.mxu0 0.0
          %402 = vmatpush1.msra.mxu0 0.0
          %403 = vmatprep.subr.mxu0 0.0
          %404 = vmatpush1.msra.mxu0 0.0
          %405 = vmatprep.subr.mxu0 0.0
          %406 = vmatpush1.msra.mxu0 0.0
          %407 = vmatprep.subr.mxu0 0.0
          %408 = vmatpush1.msra.mxu0 0.0
          %409 = vmatprep.subr.mxu0 0.0
          %410 = vmatpush1.msra.mxu0 0.0
          %411 = vmatprep.subr.mxu0 0.0
          %412 = vmatpush1.msra.mxu0 0.0
          %413 = vmatprep.subr.mxu0 0.0
          %414 = vmatpush1.msra.mxu0 0.0
          %415 = vmatprep.subr.mxu0 0.0
          %416 = vmatpush1.msra.mxu0 0.0
          %417 = vmatprep.subr.mxu0 0.0
          %418 = vmatpush1.msra.mxu0 0.0
          %419 = vmatprep.subr.mxu0 0.0
          %420 = vmatpush1.msra.mxu0 0.0
          %421 = vmatprep.subr.mxu0 0.0
          %422 = vmatpush1.msra.mxu0 0.0
          %423 = vmatprep.subr.mxu0 0.0
          %424 = vmatpush1.msra.mxu0 0.0
          %425 = vmatprep.subr.mxu0 0.0
          %426 = vmatpush1.msra.mxu0 0.0
          %427 = vmatprep.subr.mxu0 0.0
          %428 = vmatpush1.msra.mxu0 0.0
          %429 = vmatprep.subr.mxu0 0.0
          %430 = vmatpush1.msra.mxu0 0.0
          %431 = vmatprep.subr.mxu0 0.0
          %432 = vmatpush1.msra.mxu0 0.0
          %433 = vmatprep.subr.mxu0 0.0
          %434 = vmatpush1.msra.mxu0 0.0
          %435 = vmatprep.subr.mxu0 0.0
          %436 = vmatpush1.msra.mxu0 0.0
          %437 = vmatprep.subr.mxu0 0.0
          %438 = vmatpush1.msra.mxu0 0.0
          %439 = vmatprep.subr.mxu0 0.0
          %440 = vmatpush1.msra.mxu0 0.0
          %441 = vmatprep.subr.mxu0 0.0
          %442 = vmatpush1.msra.mxu0 0.0
          %443 = vmatprep.subr.mxu0 0.0
          %444 = vmatpush1.msra.mxu0 0.0
          %445 = vmatprep.subr.mxu0 0.0
          %446 = vmatpush1.msra.mxu0 0.0
          %447 = vmatprep.subr.mxu0 0.0
          %448 = vmatpush1.msra.mxu0 0.0
          %449 = vmatprep.subr.mxu0 0.0
          %450 = vmatpush1.msra.mxu0 0.0
          %451 = vmatprep.subr.mxu0 0.0
          %452 = vmatpush1.msra.mxu0 0.0
          %453 = vmatprep.subr.mxu0 0.0
          %454 = vmatpush1.msra.mxu0 0.0
          %455 = vmatprep.subr.mxu0 0.0
          %456 = vmatpush1.msra.mxu0 0.0
          %457 = vmatprep.subr.mxu0 0.0
          %458 = vmatpush1.msra.mxu0 0.0
          %459 = vmatprep.subr.mxu0 0.0
          %460 = vmatpush1.msra.mxu0 0.0
          %461 = vmatprep.mubr.f32.mxu0 0.0
          %462 = vmatmul.mubr.f32.gmra.mrb[0].mxu0 %v374
          %v463 = vpop.f32.mrb[0].mxu0
          %v464 = vadd.f32 %v370, %v463
          %v465 = vpop.f32.mrb[0].mxu0
          %466 = vmatprep.mubr.f32.mxu0 0.0
          %467 = vmatmul.mubr.f32.gmra.mrb[0].mxu0 %v377
          %v468 = vpop.f32.mrb[0].mxu0
          %v469 = vadd.f32 %v370, %v468
          %v470 = vpop.f32.mrb[0].mxu0
          %471 = vmatprep.mubr.f32.mxu0 0.0
          %472 = vmatmul.mubr.f32.gmra.mrb[0].mxu0 %v380
          %v473 = vpop.f32.mrb[0].mxu0
          %v474 = vadd.f32 %v370, %v473
          %v475 = vpop.f32.mrb[0].mxu0
          %476 = vmatprep.mubr.f32.mxu0 0.0
          %477 = vmatmul.mubr.f32.gmra.mrb[0].mxu0 %v383
          %v478 = vpop.f32.mrb[0].mxu0
          %v479 = vadd.f32 %v370, %v478
          %v480 = vpop.f32.mrb[0].mxu0
          %481 = vmatprep.mubr.f32.mxu0 0.0
          %482 = vmatmul.mubr.f32.gmra.mrb[0].mxu0 %v386
          %v483 = vpop.f32.mrb[0].mxu0
          %v484 = vadd.f32 %v370, %v483
          %v485 = vpop.f32.mrb[0].mxu0
          %486 = vmatprep.mubr.f32.mxu0 0.0
          %487 = vmatmul.mubr.f32.gmra.mrb[0].mxu0 %v389
          %v488 = vpop.f32.mrb[0].mxu0
          %v489 = vadd.f32 %v370, %v488
          %v490 = vpop.f32.mrb[0].mxu0
          %491 = vmatprep.mubr.f32.mxu0 0.0
          %492 = vmatmul.mubr.f32.gmra.mrb[0].mxu0 %v392
          %v493 = vpop.f32.mrb[0].mxu0
          %v494 = vadd.f32 %v370, %v493
          %v495 = vpop.f32.mrb[0].mxu0
          %496 = vmatprep.mubr.f32.mxu0 0.0
          %497 = vmatmul.mubr.f32.gmra.mrb[0].mxu0 %v395
          %v498 = vpop.f32.mrb[0].mxu0
          %v499 = vadd.f32 %v370, %v498
          %v500 = vpop.f32.mrb[0].mxu0
          %501 = vdwg.mxu0
          %502 = vst [vmem:[#allocation2] sm:$0xff] %v464
          %503 = vst [vmem:[#allocation2 + $0x8] sm:$0xff] %v469
          %504 = vst [vmem:[#allocation2 + $0x10] sm:$0xff] %v474
          %505 = vst [vmem:[#allocation2 + $0x18] sm:$0xff] %v479
          %506 = vst [vmem:[#allocation2 + $0x20] sm:$0xff] %v484
          %507 = vst [vmem:[#allocation2 + $0x28] sm:$0xff] %v489
          %508 = vst [vmem:[#allocation2 + $0x30] sm:$0xff] %v494
          %509 = vst [vmem:[#allocation2 + $0x38] sm:$0xff] %v499
        $region86: #{tpu_custom_call.1} parent=77 // pred_fallthru
          _
        %v510 = vld [vmem:[%s300] sm:$0xff]
        %v511 = vld [vmem:[%s300 + $0x8] sm:$0xff]
        %v512 = vunpack.c.l.s8.bf16 %v510
        %v513 = vunpack.c.h.s8.bf16 %v510
        %v514 = vunpack.c.l.s8.bf16 %v511
        %v515 = vunpack.c.h.s8.bf16 %v511
        %v516 = vld [vmem:[%s347] sm:$0xf]
        %v517 = vld [vmem:[%s347 + $0x4] sm:$0xf]
        %v518 = vld [vmem:[%s347 + $0x8] sm:$0xf]
        %v519 = vld [vmem:[%s347 + $0xc] sm:$0xf]
        %v520 = vld [vmem:[%s347 + $0x10] sm:$0xf]
        %v521 = vld [vmem:[%s347 + $0x14] sm:$0xf]
        %v522 = vld [vmem:[%s347 + $0x18] sm:$0xf]
        %v523 = vld [vmem:[%s347 + $0x1c] sm:$0xf]
        %v524 = vld [vmem:[%s347 + $0x20] sm:$0xf]
        %v525 = vld [vmem:[%s347 + $0x24] sm:$0xf]
        %v526 = vld [vmem:[%s347 + $0x28] sm:$0xf]
        %v527 = vld [vmem:[%s347 + $0x2c] sm:$0xf]
        %v528 = vld [vmem:[%s347 + $0x30] sm:$0xf]
        %v529 = vld [vmem:[%s347 + $0x34] sm:$0xf]
        %v530 = vld [vmem:[%s347 + $0x38] sm:$0xf]
        %v531 = vld [vmem:[%s347 + $0x3c] sm:$0xf]
        %v548 = vunpack.c.l.b16 %v516
        %v549 = vunpack.c.l.b16 %v517
        %v550 = vunpack.c.l.b16 %v518
        %v551 = vunpack.c.l.b16 %v519
        %v552 = vunpack.c.l.b16 %v520
        %v553 = vunpack.c.l.b16 %v521
        %v554 = vunpack.c.l.b16 %v522
        %v555 = vunpack.c.l.b16 %v523
        %v556 = vunpack.c.l.b16 %v524
        %v557 = vunpack.c.l.b16 %v525
        %v558 = vunpack.c.l.b16 %v526
        %v559 = vunpack.c.l.b16 %v527
        %v560 = vunpack.c.l.b16 %v528
        %v561 = vunpack.c.l.b16 %v529
        %v562 = vunpack.c.l.b16 %v530
        %v563 = vunpack.c.l.b16 %v531
        %v564 = vpack.c.b16 %v549, %v548
        %v565 = vpack.c.b16 %v551, %v550
        %v566 = vpack.c.b16 %v553, %v552
        %v567 = vpack.c.b16 %v555, %v554
        %v568 = vpack.c.b16 %v557, %v556
        %v569 = vpack.c.b16 %v559, %v558
        %v570 = vpack.c.b16 %v561, %v560
        %v571 = vpack.c.b16 %v563, %v562
        %580 = vmatprep.subr.bf16.mxu0 0
        %581 = vmatpush1.bf16.msra.mxu0 %v564
        %582 = vmatprep.subr.bf16.mxu0 0
        %583 = vmatpush1.bf16.msra.mxu0 %v565
        %584 = vmatprep.subr.bf16.mxu0 0
        %585 = vmatpush1.bf16.msra.mxu0 %v566
        %586 = vmatprep.subr.bf16.mxu0 0
        %587 = vmatpush1.bf16.msra.mxu0 %v567
        %588 = vmatprep.subr.bf16.mxu0 0
        %589 = vmatpush1.bf16.msra.mxu0 %v568
        %590 = vmatprep.subr.bf16.mxu0 0
        %591 = vmatpush1.bf16.msra.mxu0 %v569
        %592 = vmatprep.subr.bf16.mxu0 0
        %593 = vmatpush1.bf16.msra.mxu0 %v570
        %594 = vmatprep.subr.bf16.mxu0 0
        %595 = vmatpush1.bf16.msra.mxu0 %v571
        %596 = vmatprep.subr.bf16.mxu0 0
        %597 = vmatpush1.bf16.msra.mxu0 0
        %598 = vmatprep.subr.bf16.mxu0 0
        %599 = vmatpush1.bf16.msra.mxu0 0
        %600 = vmatprep.subr.bf16.mxu0 0
        %601 = vmatpush1.bf16.msra.mxu0 0
        %602 = vmatprep.subr.bf16.mxu0 0
        %603 = vmatpush1.bf16.msra.mxu0 0
        %604 = vmatprep.subr.bf16.mxu0 0
        %605 = vmatpush1.bf16.msra.mxu0 0
        %606 = vmatprep.subr.bf16.mxu0 0
        %607 = vmatpush1.bf16.msra.mxu0 0
        %608 = vmatprep.subr.bf16.mxu0 0
        %609 = vmatpush1.bf16.msra.mxu0 0
        %610 = vmatprep.subr.bf16.mxu0 0
        %611 = vmatpush1.bf16.msra.mxu0 0
        %612 = vmatprep.mubr.bf16.mxu0 0
        %613 = vmatmul.mubr.bf16.gmra.mrb[0].mxu0 %v512
        %v614 = vpop.f32.mrb[0].mxu0
        %v615 = vadd.f32 0.0, %v614
        %v616 = vpop.f32.mrb[0].mxu0
        %v617 = vpop.f32.mrb[0].mxu0
        %v618 = vadd.f32 0.0, %v617
        %v619 = vpop.f32.mrb[0].mxu0
        %620 = vmatprep.mubr.bf16.mxu0 0
        %621 = vmatmul.mubr.bf16.gmra.mrb[0].mxu0 %v513
        %v622 = vpop.f32.mrb[0].mxu0
        %v623 = vadd.f32 0.0, %v622
        %v624 = vpop.f32.mrb[0].mxu0
        %v625 = vpop.f32.mrb[0].mxu0
        %v626 = vadd.f32 0.0, %v625
        %v627 = vpop.f32.mrb[0].mxu0
        %628 = vmatprep.mubr.bf16.mxu0 0
        %629 = vmatmul.mubr.bf16.gmra.mrb[0].mxu0 %v514
        %v630 = vpop.f32.mrb[0].mxu0
        %v631 = vadd.f32 0.0, %v630
        %v632 = vpop.f32.mrb[0].mxu0
        %v633 = vpop.f32.mrb[0].mxu0
        %v634 = vadd.f32 0.0, %v633
        %v635 = vpop.f32.mrb[0].mxu0
        %636 = vmatprep.mubr.bf16.mxu0 0
        %637 = vmatmul.mubr.bf16.gmra.mrb[0].mxu0 %v515
        %v638 = vpop.f32.mrb[0].mxu0
        %v639 = vadd.f32 0.0, %v638
        %v640 = vpop.f32.mrb[0].mxu0
        %v641 = vpop.f32.mrb[0].mxu0
        %v642 = vadd.f32 0.0, %v641
        %v643 = vpop.f32.mrb[0].mxu0
        %644 = vdwg.mxu0
        %v645 = vld [vmem:[#allocation2] sm:$0xff]
        %v646 = vld [vmem:[#allocation2 + $0x8] sm:$0xff]
        %v647 = vld [vmem:[#allocation2 + $0x10] sm:$0xff]
        %v648 = vld [vmem:[#allocation2 + $0x18] sm:$0xff]
        %v649 = vld [vmem:[#allocation2 + $0x20] sm:$0xff]
        %v650 = vld [vmem:[#allocation2 + $0x28] sm:$0xff]
        %v651 = vld [vmem:[#allocation2 + $0x30] sm:$0xff]
        %v652 = vld [vmem:[#allocation2 + $0x38] sm:$0xff]
        %v653 = vld [vmem:[%s4] sm:$0xff]
        %vm654 = vcmask 64512
        %v656 = vsel %vm654, %v615, 0
        %v659 = vsel %vm654, %v618, 0
        %v662 = vsel %vm654, %v623, 0
        %v665 = vsel %vm654, %v626, 0
        %v668 = vsel %vm654, %v631, 0
        %v671 = vsel %vm654, %v634, 0
        %v674 = vsel %vm654, %v639, 0
        %v677 = vsel %vm654, %v642, 0
        %679 = vmatprep.subr.mxu0 0.0
        %680 = vmatpush1.msra.mxu0 %v653
        %681 = vmatprep.subr.mxu0 0.0
        %682 = vmatpush1.msra.mxu0 0.0
        %683 = vmatprep.subr.mxu0 0.0
        %684 = vmatpush1.msra.mxu0 0.0
        %685 = vmatprep.subr.mxu0 0.0
        %686 = vmatpush1.msra.mxu0 0.0
        %687 = vmatprep.subr.mxu0 0.0
        %688 = vmatpush1.msra.mxu0 0.0
        %689 = vmatprep.subr.mxu0 0.0
        %690 = vmatpush1.msra.mxu0 0.0
        %691 = vmatprep.subr.mxu0 0.0
        %692 = vmatpush1.msra.mxu0 0.0
        %693 = vmatprep.subr.mxu0 0.0
        %694 = vmatpush1.msra.mxu0 0.0
        %695 = vmatprep.subr.mxu0 0.0
        %696 = vmatpush1.msra.mxu0 0.0
        %697 = vmatprep.subr.mxu0 0.0
        %698 = vmatpush1.msra.mxu0 0.0
        %699 = vmatprep.subr.mxu0 0.0
        %700 = vmatpush1.msra.mxu0 0.0
        %701 = vmatprep.subr.mxu0 0.0
        %702 = vmatpush1.msra.mxu0 0.0
        %703 = vmatprep.subr.mxu0 0.0
        %704 = vmatpush1.msra.mxu0 0.0
        %705 = vmatprep.subr.mxu0 0.0
        %706 = vmatpush1.msra.mxu0 0.0
        %707 = vmatprep.subr.mxu0 0.0
        %708 = vmatpush1.msra.mxu0 0.0
        %709 = vmatprep.subr.mxu0 0.0
        %710 = vmatpush1.msra.mxu0 0.0
        %711 = vmatprep.subr.mxu0 0.0
        %712 = vmatpush1.msra.mxu0 0.0
        %713 = vmatprep.subr.mxu0 0.0
        %714 = vmatpush1.msra.mxu0 0.0
        %715 = vmatprep.subr.mxu0 0.0
        %716 = vmatpush1.msra.mxu0 0.0
        %717 = vmatprep.subr.mxu0 0.0
        %718 = vmatpush1.msra.mxu0 0.0
        %719 = vmatprep.subr.mxu0 0.0
        %720 = vmatpush1.msra.mxu0 0.0
        %721 = vmatprep.subr.mxu0 0.0
        %722 = vmatpush1.msra.mxu0 0.0
        %723 = vmatprep.subr.mxu0 0.0
        %724 = vmatpush1.msra.mxu0 0.0
        %725 = vmatprep.subr.mxu0 0.0
        %726 = vmatpush1.msra.mxu0 0.0
        %727 = vmatprep.subr.mxu0 0.0
        %728 = vmatpush1.msra.mxu0 0.0
        %729 = vmatprep.subr.mxu0 0.0
        %730 = vmatpush1.msra.mxu0 0.0
        %731 = vmatprep.subr.mxu0 0.0
        %732 = vmatpush1.msra.mxu0 0.0
        %733 = vmatprep.subr.mxu0 0.0
        %734 = vmatpush1.msra.mxu0 0.0
        %735 = vmatprep.subr.mxu0 0.0
        %736 = vmatpush1.msra.mxu0 0.0
        %737 = vmatprep.subr.mxu0 0.0
        %738 = vmatpush1.msra.mxu0 0.0
        %739 = vmatprep.subr.mxu0 0.0
        %740 = vmatpush1.msra.mxu0 0.0
        %741 = vmatprep.subr.mxu0 0.0
        %742 = vmatpush1.msra.mxu0 0.0
        %743 = vmatprep.mubr.f32.mxu0 0.0
        %744 = vmatmul.mubr.f32.gmra.mrb[0].mxu0 %v656
        %v745 = vpop.f32.mrb[0].mxu0
        %v746 = vadd.f32 0.0, %v745
        %v747 = vpop.f32.mrb[0].mxu0
        %748 = vmatprep.mubr.f32.mxu0 0.0
        %749 = vmatmul.mubr.f32.gmra.mrb[0].mxu0 %v659
        %v750 = vpop.f32.mrb[0].mxu0
        %v751 = vadd.f32 0.0, %v750
        %v752 = vpop.f32.mrb[0].mxu0
        %753 = vmatprep.mubr.f32.mxu0 0.0
        %754 = vmatmul.mubr.f32.gmra.mrb[0].mxu0 %v662
        %v755 = vpop.f32.mrb[0].mxu0
        %v756 = vadd.f32 0.0, %v755
        %v757 = vpop.f32.mrb[0].mxu0
        %758 = vmatprep.mubr.f32.mxu0 0.0
        %759 = vmatmul.mubr.f32.gmra.mrb[0].mxu0 %v665
        %v760 = vpop.f32.mrb[0].mxu0
        %v761 = vadd.f32 0.0, %v760
        %v762 = vpop.f32.mrb[0].mxu0
        %763 = vmatprep.mubr.f32.mxu0 0.0
        %764 = vmatmul.mubr.f32.gmra.mrb[0].mxu0 %v668
        %v765 = vpop.f32.mrb[0].mxu0
        %v766 = vadd.f32 0.0, %v765
        %v767 = vpop.f32.mrb[0].mxu0
        %768 = vmatprep.mubr.f32.mxu0 0.0
        %769 = vmatmul.mubr.f32.gmra.mrb[0].mxu0 %v671
        %v770 = vpop.f32.mrb[0].mxu0
        %v771 = vadd.f32 0.0, %v770
        %v772 = vpop.f32.mrb[0].mxu0
        %773 = vmatprep.mubr.f32.mxu0 0.0
        %774 = vmatmul.mubr.f32.gmra.mrb[0].mxu0 %v674
        %v775 = vpop.f32.mrb[0].mxu0
        %v776 = vadd.f32 0.0, %v775
        %v777 = vpop.f32.mrb[0].mxu0
        %778 = vmatprep.mubr.f32.mxu0 0.0
        %779 = vmatmul.mubr.f32.gmra.mrb[0].mxu0 %v677
        %v780 = vpop.f32.mrb[0].mxu0
        %v781 = vadd.f32 0.0, %v780
        %v782 = vpop.f32.mrb[0].mxu0
        %783 = vdwg.mxu0
        %v784 = vadd.f32 %v645, %v746
        %v785 = vadd.f32 %v646, %v751
        %v786 = vadd.f32 %v647, %v756
        %v787 = vadd.f32 %v648, %v761
        %v788 = vadd.f32 %v649, %v766
        %v789 = vadd.f32 %v650, %v771
        %v790 = vadd.f32 %v651, %v776
        %v791 = vadd.f32 %v652, %v781
        %792 = vst [vmem:[#allocation2] sm:$0xff] %v784
        %793 = vst [vmem:[#allocation2 + $0x8] sm:$0xff] %v785
        %794 = vst [vmem:[#allocation2 + $0x10] sm:$0xff] %v786
        %795 = vst [vmem:[#allocation2 + $0x18] sm:$0xff] %v787
        %796 = vst [vmem:[#allocation2 + $0x20] sm:$0xff] %v788
        %797 = vst [vmem:[#allocation2 + $0x28] sm:$0xff] %v789
        %798 = vst [vmem:[#allocation2 + $0x30] sm:$0xff] %v790
        %799 = vst [vmem:[#allocation2 + $0x38] sm:$0xff] %v791
        %p800 = scmp.eq.s32.totalorder %s25, 1
        // Predicated region
        $region87: #{tpu_custom_call.1} parent=77 // pred_check
          %p801 = pneg %p800
        $region88: #{tpu_custom_call.1} parent=77 // pred_check_branch
          %803 = sbr.rel (%p801) target = $region90
        $region89: #{tpu_custom_call.1} parent=77 // pred_region
          %v804 = vld [vmem:[#allocation2] sm:$0xff]
          %v805 = vld [vmem:[#allocation2 + $0x8] sm:$0xff]
          %v806 = vld [vmem:[#allocation2 + $0x10] sm:$0xff]
          %v807 = vld [vmem:[#allocation2 + $0x18] sm:$0xff]
          %v808 = vld [vmem:[#allocation2 + $0x20] sm:$0xff]
          %v809 = vld [vmem:[#allocation2 + $0x28] sm:$0xff]
          %v810 = vld [vmem:[#allocation2 + $0x30] sm:$0xff]
          %v811 = vld [vmem:[#allocation2 + $0x38] sm:$0xff]
          %812 = vst [vmem:[%s336] sm:$0xff] %v804
          %813 = vst [vmem:[%s336 + $0x8] sm:$0xff] %v805
          %814 = vst [vmem:[%s336 + $0x10] sm:$0xff] %v806
          %815 = vst [vmem:[%s336 + $0x18] sm:$0xff] %v807
          %816 = vst [vmem:[%s336 + $0x20] sm:$0xff] %v808
          %817 = vst [vmem:[%s336 + $0x28] sm:$0xff] %v809
          %818 = vst [vmem:[%s336 + $0x30] sm:$0xff] %v810
          %819 = vst [vmem:[%s336 + $0x38] sm:$0xff] %v811
        $region90: #{tpu_custom_call.1} parent=77 // pred_fallthru
          _
        %s820 = sand.u32 %s183, 1
        %s821 = scalar_lea.sflag [#allocation5], %s820
        %s822 = sand.u32 %s183, 1
        %s823 = smul.addr %s822, 64
        %s824 = scalar_lea.vmem [#allocation4], %s823
        // Predicated region
        $region91: #{tpu_custom_call.1} parent=77 // pred_check
          %p825 = pneg %p193
        $region92: #{tpu_custom_call.1} parent=77 // pred_check_branch
          %827 = sbr.rel (%p825) target = $region94
        $region93: #{tpu_custom_call.1} parent=77 // pred_region
          %s828 = smul.u32 8, %s24
          %s830 = ssub.s32 1024, 1024
          %831 = vsyncadd %s821, %s830
          %s832 = smul.addr %s828, 128
          %s833 = scalar_lea.hbm %s6, %s832
          %s834 = sshll.u32 %s824, 4
          %s835 = int_to_ptr.vmem [resolvable:$true] %s834
          %840 = dma.vmem_to_hbm [thread:$0]  %s835, 1024, %s833, %s821, 128, 128, 8
        $region94: #{tpu_custom_call.1} parent=77 // pred_fallthru
          _
      $region78: #{tpu_custom_call.1} parent=5 // pred_fallthru
        _
      %p841 = scmp.le.s32.totalorder 2, %s15
      // Predicated region
      $region95: #{tpu_custom_call.1} parent=5 // pred_check
        %p842 = pneg %p841
      $region96: #{tpu_custom_call.1} parent=5 // pred_check_branch
        %844 = sbr.rel (%p842) target = $region98
      $region97: #{tpu_custom_call.1} parent=5 // pred_region
        %s845 = ssub.s32 %s15, 2
        // Predicated region
        $region99: #{tpu_custom_call.1} parent=97 // pred_check
          %p846 = pneg %p199
        $region100: #{tpu_custom_call.1} parent=97 // pred_check_branch
          %848 = sbr.rel (%p846) target = $region102
        $region101: #{tpu_custom_call.1} parent=97 // pred_region
          %s849 = sand.u32 %s184, 1
          %s850 = scalar_lea.sflag [#allocation5], %s849
          %s851 = sand.u32 %s184, 1
          %s852 = smul.addr %s851, 64
          %s853 = scalar_lea.vmem [#allocation4], %s852
          %854 = dma.done %s850, 1024
        $region102: #{tpu_custom_call.1} parent=97 // pred_fallthru
          _
      $region98: #{tpu_custom_call.1} parent=5 // pred_fallthru
        _
    $region6: #{tpu_custom_call.1} parent=1 // loop_footer
      %s19 = sadd.s32 1, %s15
    $region7: #{tpu_custom_call.1} parent=1 // loop_footer_branch
      %14 = sbr.rel target = $region3
    $region8: #{tpu_custom_call.1} parent=1 // loop_exit
      _
    %855 = vsyncpa [#allocation5], 1
    %s856 = scalar_lea.sflag [#allocation5], 1
    %857 = vsyncpa %s856, 1

</llo_original>
